<compile_context>
chip_gen: v6e
topology: v6e:2x2x1
jax: 0.10.0
libtpu: 0.0.40
codegen_flags: <defaults>
</compile_context>

<pallas_src>
import functools

import jax
import jax.numpy as jnp
from jax.experimental import pallas as pl
from jax.experimental.pallas import tpu as pltpu


def _vsilu_kernel(x_ref, w_ref, b_ref, blade_ref, o_ref):
    # x_ref:     (1, C, TL)  lanes interleaved as (..., spatial, blade)
    # w_ref:     (3, C, 1)   per-blade depthwise weights (leading-axis slice per blade)
    # b_ref:     (C, 1)      bias
    # blade_ref: (1, TL)     int32 lane % 3 pattern (tile-invariant since TL % 3 == 0)
    x = x_ref[0]                                  # (C, TL)
    tl = x.shape[-1]

    m = blade_ref[...]                            # (1, TL), broadcasts over channels
    is0 = m == 0
    is1 = m == 1

    # Neighbouring lanes via XLU rotates (jnp.roll semantics: roll(x, s)[j] = x[j - s]).
    # TL is a multiple of 3 (or the full extent), so a blade triple never straddles the tile
    # edge and the wrapped lanes are never selected.
    xm1 = pltpu.roll(x, shift=1, axis=1)          # x[j - 1]
    xm2 = pltpu.roll(x, shift=2, axis=1)          # x[j - 2]
    xp1 = pltpu.roll(x, shift=tl - 1, axis=1)     # x[j + 1]
    xp2 = pltpu.roll(x, shift=tl - 2, axis=1)     # x[j + 2]

    # Gather, for every lane, the three blade components of its own spatial position.
    x_b0 = jnp.where(is0, x, jnp.where(is1, xm1, xm2))
    x_b1 = jnp.where(is0, xp1, jnp.where(is1, x, xm1))
    x_b2 = jnp.where(is0, xp2, jnp.where(is1, xp1, x))

    w0 = w_ref[0]                                 # (C, 1) -> broadcasts over lanes
    w1 = w_ref[1]
    w2 = w_ref[2]
    lin = w0 * x_b0 + w1 * x_b1 + w2 * x_b2 + b_ref[...]     # three VPU FMAs, no MXU

    # sigmoid(lin) = 1 / (1 + exp(-lin)); exp lives on the EUP slot.
    gate = pl.reciprocal(1.0 + jnp.exp(-lin), approx=False)
    o_ref[0] = x * gate                           # gate is identical across each blade triple


def _pick_lane_tile(lane_extent, channels, max_lanes=1536):
    """Lane tile: multiple of 384 = lcm(3 blades, 128 lanes), sized for VMEM.

    Pallas double-buffers input and output, so ~4 * C * TL * 4 bytes are live; keep that
    comfortably under v7x's 32 MiB scoped-VMEM default (v5e/v6e have more headroom).
    """
    budget_lanes = (12 * 1024 * 1024) // (16 * channels)
    cap = max(384, min(max_lanes, (budget_lanes // 384) * 384))
    if lane_extent <= cap:
        return lane_extent                        # single full-extent tile
    tile = (cap // 384) * 384
    while tile >= 384:
        if lane_extent % tile == 0:
            return tile
        tile -= 384
    return 384  # ragged final tile: still 3-aligned; Pallas drops out-of-range stores


def clifford_g3_linear_vsilu(x, weight, bias, *, max_lanes=1536):
    """x: [B, C, D, H, 3], weight: [C, 3], bias: [C] -> [B, C, D, H, 3]."""
    B, C, D, H, K = x.shape
    assert K == 3
    L = D * H * 3

    # Contiguous-dim merges/splits only: no HBM transpose round trips.
    x_flat = x.reshape(B, C, L)
    w_k = jnp.transpose(weight).reshape(3, C, 1)   # tiny (3*C) reshape, negligible
    b_k = bias.reshape(C, 1)

    TL = _pick_lane_tile(L, C, max_lanes)
    blade = (jnp.arange(TL, dtype=jnp.int32) % 3).reshape(1, TL)
    grid = (B, pl.cdiv(L, TL))

    out_flat = pl.pallas_call(
        _vsilu_kernel,
        out_shape=jax.ShapeDtypeStruct((B, C, L), x.dtype),
        grid_spec=pltpu.PrefetchScalarGridSpec(
            num_scalar_prefetch=0,
            grid=grid,
            in_specs=[
                pl.BlockSpec((1, C, TL), lambda b, s: (b, 0, s)),
                pl.BlockSpec((3, C, 1), lambda b, s: (0, 0, 0)),
                pl.BlockSpec((C, 1), lambda b, s: (0, 0)),
                pl.BlockSpec((1, TL), lambda b, s: (0, 0)),
            ],
            out_specs=pl.BlockSpec((1, C, TL), lambda b, s: (b, 0, s)),
        ),
        compiler_params=pltpu.CompilerParams(
            # Both axes are independent -> shardable across v7x's 2 TensorCores.
            dimension_semantics=("parallel", "parallel"),
            vmem_limit_bytes=32 * 1024 * 1024,
        ),
    )(x_flat, w_k, b_k, blade)

    return out_flat.reshape(B, C, D, H, 3)


def reference(x, weight, bias):
    # Pure-JAX reference of the PyTorch forward.
    lin = jnp.einsum("bcdhk,ck->bcdh", x, weight) + bias[None, :, None, None]
    return x * jax.nn.sigmoid(lin)[..., None]


if __name__ == "__main__":
    B, C, D, H = 2, 8, 8, 32      # S = D*H = 256 -> interleaved lane extent L = 768
    key = jax.random.PRNGKey(0)
    kx, kw, kb = jax.random.split(key, 3)

    x = jax.random.normal(kx, (B, C, D, H, 3), dtype=jnp.float32)

    # Conv3d(C, C, (1,1,3), groups=C) parameters: weight (C,1,1,1,3) -> (C,3); bias (C,)
    # PyTorch default init: uniform(-sqrt(1/3), sqrt(1/3)).
    bound = (1.0 / 3.0) ** 0.5
    weight = jax.random.uniform(kw, (C, 3), minval=-bound, maxval=bound, dtype=jnp.float32)
    bias = jax.random.uniform(kb, (C,), minval=-bound, maxval=bound, dtype=jnp.float32)

    # jit so the boundary reshapes fuse to nothing; max_lanes=384 forces the multi-tile,
    # pipelined path (grid = (2, 2)) even at this small demo size.
    fn = jax.jit(functools.partial(clifford_g3_linear_vsilu, max_lanes=384))
    out = jax.block_until_ready(fn(x, weight, bias))

    ref = reference(x, weight, bias)
    assert out.shape == (B, C, D, H, 3)
    assert jnp.allclose(out, ref, atol=1e-5, rtol=1e-5)
    print("KERNEL_OK")
</pallas_src>

<mosaic_0001>
module attributes {stable_mosaic.version = 11 : i64} {
  func.func @_vsilu_kernel(%arg0: i32, %arg1: i32, %arg2: memref<1x8x384xf32, #tpu.memory_space<vmem>>, %arg3: memref<3x8x1xf32, #tpu.memory_space<vmem>>, %arg4: memref<8x1xf32, #tpu.memory_space<vmem>>, %arg5: memref<1x384xi32, #tpu.memory_space<vmem>>, %arg6: memref<1x8x384xf32, #tpu.memory_space<vmem>>) attributes {dimension_semantics = [#tpu.dimension_semantics<parallel>, #tpu.dimension_semantics<parallel>], iteration_bounds = array<i64: 2, 2>, scalar_prefetch = 0 : i64, scratch_operands = 0 : i64, tpu.core_type = #tpu.core_type<tc>, window_params = [{transform_indices = @transform_0, window_bounds = array<i64: 1, 8, 384>}, {pipeline_mode = #tpu.pipeline_mode<synchronous>, transform_indices = @transform_1, window_bounds = array<i64: 3, 8, 1>}, {pipeline_mode = #tpu.pipeline_mode<synchronous>, transform_indices = @transform_2, window_bounds = array<i64: 8, 1>}, {pipeline_mode = #tpu.pipeline_mode<synchronous>, transform_indices = @transform_3, window_bounds = array<i64: 1, 384>}, {transform_indices = @transform_4, window_bounds = array<i64: 1, 8, 384>}]} {
    %c0 = arith.constant 0 : index
    %c0_0 = arith.constant 0 : index
    %c0_1 = arith.constant 0 : index
    %0 = vector.load %arg2[%c0, %c0_0, %c0_1] : memref<1x8x384xf32, #tpu.memory_space<vmem>>, vector<1x8x384xf32>
    %1 = vector.shape_cast %0 : vector<1x8x384xf32> to vector<8x384xf32>
    %c0_2 = arith.constant 0 : index
    %c0_3 = arith.constant 0 : index
    %2 = vector.load %arg5[%c0_2, %c0_3] : memref<1x384xi32, #tpu.memory_space<vmem>>, vector<1x384xi32>
    %c0_i32 = arith.constant 0 : i32
    %3 = vector.broadcast %c0_i32 : i32 to vector<1x384xi32>
    %4 = arith.cmpi eq, %2, %3 : vector<1x384xi32>
    %c1_i32 = arith.constant 1 : i32
    %5 = vector.broadcast %c1_i32 : i32 to vector<1x384xi32>
    %6 = arith.cmpi eq, %2, %5 : vector<1x384xi32>
    %c1_i32_4 = arith.constant 1 : i32
    %7 = tpu.dynamic_rotate %1 by %c1_i32_4 dim 1 : vector<8x384xf32>, i32 -> vector<8x384xf32>
    %c2_i32 = arith.constant 2 : i32
    %8 = tpu.dynamic_rotate %1 by %c2_i32 dim 1 : vector<8x384xf32>, i32 -> vector<8x384xf32>
    %c383_i32 = arith.constant 383 : i32
    %9 = tpu.dynamic_rotate %1 by %c383_i32 dim 1 : vector<8x384xf32>, i32 -> vector<8x384xf32>
    %c382_i32 = arith.constant 382 : i32
    %10 = tpu.dynamic_rotate %1 by %c382_i32 dim 1 : vector<8x384xf32>, i32 -> vector<8x384xf32>
    %11 = vector.shape_cast %6 : vector<1x384xi1> to vector<1x384xi1>
    %12 = vector.broadcast %11 : vector<1x384xi1> to vector<8x384xi1>
    %13 = arith.select %12, %7, %8 : vector<8x384xi1>, vector<8x384xf32>
    %14 = vector.shape_cast %4 : vector<1x384xi1> to vector<1x384xi1>
    %15 = vector.broadcast %14 : vector<1x384xi1> to vector<8x384xi1>
    %16 = arith.select %15, %1, %13 : vector<8x384xi1>, vector<8x384xf32>
    %17 = vector.shape_cast %6 : vector<1x384xi1> to vector<1x384xi1>
    %18 = vector.broadcast %17 : vector<1x384xi1> to vector<8x384xi1>
    %19 = arith.select %18, %1, %7 : vector<8x384xi1>, vector<8x384xf32>
    %20 = vector.shape_cast %4 : vector<1x384xi1> to vector<1x384xi1>
    %21 = vector.broadcast %20 : vector<1x384xi1> to vector<8x384xi1>
    %22 = arith.select %21, %9, %19 : vector<8x384xi1>, vector<8x384xf32>
    %23 = vector.shape_cast %6 : vector<1x384xi1> to vector<1x384xi1>
    %24 = vector.broadcast %23 : vector<1x384xi1> to vector<8x384xi1>
    %25 = arith.select %24, %9, %1 : vector<8x384xi1>, vector<8x384xf32>
    %26 = vector.shape_cast %4 : vector<1x384xi1> to vector<1x384xi1>
    %27 = vector.broadcast %26 : vector<1x384xi1> to vector<8x384xi1>
    %28 = arith.select %27, %10, %25 : vector<8x384xi1>, vector<8x384xf32>
    %c0_5 = arith.constant 0 : index
    %c0_6 = arith.constant 0 : index
    %c0_7 = arith.constant 0 : index
    %29 = vector.load %arg3[%c0_5, %c0_6, %c0_7] : memref<3x8x1xf32, #tpu.memory_space<vmem>>, vector<1x8x1xf32>
    %30 = vector.shape_cast %29 : vector<1x8x1xf32> to vector<8x1xf32>
    %c1 = arith.constant 1 : index
    %c0_8 = arith.constant 0 : index
    %c0_9 = arith.constant 0 : index
    %31 = vector.load %arg3[%c1, %c0_8, %c0_9] : memref<3x8x1xf32, #tpu.memory_space<vmem>>, vector<1x8x1xf32>
    %32 = vector.shape_cast %31 : vector<1x8x1xf32> to vector<8x1xf32>
    %c2 = arith.constant 2 : index
    %c0_10 = arith.constant 0 : index
    %c0_11 = arith.constant 0 : index
    %33 = vector.load %arg3[%c2, %c0_10, %c0_11] : memref<3x8x1xf32, #tpu.memory_space<vmem>>, vector<1x8x1xf32>
    %34 = vector.shape_cast %33 : vector<1x8x1xf32> to vector<8x1xf32>
    %35 = vector.broadcast %30 : vector<8x1xf32> to vector<8x384xf32>
    %36 = arith.mulf %35, %16 : vector<8x384xf32>
    %37 = vector.broadcast %32 : vector<8x1xf32> to vector<8x384xf32>
    %38 = arith.mulf %37, %22 : vector<8x384xf32>
    %39 = arith.addf %36, %38 : vector<8x384xf32>
    %40 = vector.broadcast %34 : vector<8x1xf32> to vector<8x384xf32>
    %41 = arith.mulf %40, %28 : vector<8x384xf32>
    %42 = arith.addf %39, %41 : vector<8x384xf32>
    %c0_12 = arith.constant 0 : index
    %c0_13 = arith.constant 0 : index
    %43 = vector.load %arg4[%c0_12, %c0_13] : memref<8x1xf32, #tpu.memory_space<vmem>>, vector<8x1xf32>
    %44 = vector.broadcast %43 : vector<8x1xf32> to vector<8x384xf32>
    %45 = arith.addf %42, %44 : vector<8x384xf32>
    %cst = arith.constant 0.000000e+00 : f32
    %46 = vector.broadcast %cst : f32 to vector<8x384xf32>
    %47 = arith.subf %46, %45 : vector<8x384xf32>
    %48 = math.exp %47 : vector<8x384xf32>
    %cst_14 = arith.constant 1.000000e+00 : f32
    %49 = vector.broadcast %cst_14 : f32 to vector<8x384xf32>
    %50 = arith.addf %49, %48 : vector<8x384xf32>
    %51 = tpu.reciprocal %50 : vector<8x384xf32> -> vector<8x384xf32>
    %52 = arith.mulf %1, %51 : vector<8x384xf32>
    %c0_15 = arith.constant 0 : index
    %c0_16 = arith.constant 0 : index
    %c0_17 = arith.constant 0 : index
    %53 = vector.load %arg6[%c0_15, %c0_16, %c0_17] : memref<1x8x384xf32, #tpu.memory_space<vmem>>, vector<1x8x384xf32>
    %54 = vector.shape_cast %53 : vector<1x8x384xf32> to vector<8x384xf32>
    %55 = vector.shape_cast %52 : vector<8x384xf32> to vector<1x8x384xf32>
    tpu.vector_store %arg6[%c0_15, %c0_16, %c0_17], %55 {strides = array<i32>} : memref<1x8x384xf32, #tpu.memory_space<vmem>>, vector<1x8x384xf32>,
    return
  }
  func.func @transform_0(%arg0: i32, %arg1: i32) -> (i32, i32, i32) {
    %c0_i32 = arith.constant 0 : i32
    %c0_i32_0 = arith.constant 0 : i32
    return %arg0, %c0_i32, %arg1 : i32, i32, i32
  }
  func.func @transform_1(%arg0: i32, %arg1: i32) -> (i32, i32, i32) {
    %c0_i32 = arith.constant 0 : i32
    %c0_i32_0 = arith.constant 0 : i32
    %c0_i32_1 = arith.constant 0 : i32
    %c0_i32_2 = arith.constant 0 : i32
    return %c0_i32, %c0_i32_0, %c0_i32_1 : i32, i32, i32
  }
  func.func @transform_2(%arg0: i32, %arg1: i32) -> (i32, i32) {
    %c0_i32 = arith.constant 0 : i32
    %c0_i32_0 = arith.constant 0 : i32
    %c0_i32_1 = arith.constant 0 : i32
    return %c0_i32, %c0_i32_0 : i32, i32
  }
  func.func @transform_3(%arg0: i32, %arg1: i32) -> (i32, i32) {
    %c0_i32 = arith.constant 0 : i32
    %c0_i32_0 = arith.constant 0 : i32
    %c0_i32_1 = arith.constant 0 : i32
    return %c0_i32, %c0_i32_0 : i32, i32
  }
  func.func @transform_4(%arg0: i32, %arg1: i32) -> (i32, i32, i32) {
    %c0_i32 = arith.constant 0 : i32
    %c0_i32_0 = arith.constant 0 : i32
    return %arg0, %c0_i32, %arg1 : i32, i32, i32
  }
}

</mosaic_0001>

<llo_original>
// kernel: clifford_g3_linear_vsilu.1
$region0: #{clifford_g3_linear_vsilu.1}
  #allocation0 [shape = 'u32[]', space=smem, size = 0x4, offset = 0x4, fixed_abs, tag = 'smem constant byte address 0x4 - core index']
  #allocation1 [shape = 'u32[144,128]{1,0:T(1,128)}', space=vmem, size = 0x12000, scoped, tag = 'internal scratch']
  %s0 = inlined_call_operand.vmem [shape: f32[2,8,768], index: 0, kind: input, shape index: {}]
  %s1 = inlined_call_operand.vmem [shape: f32[3,8,1], index: 1, kind: input, shape index: {}]
  %s2 = inlined_call_operand.vmem [shape: f32[8,1], index: 2, kind: input, shape index: {}]
  %s3 = inlined_call_operand.vmem [shape: s32[1,384], index: 3, kind: input, shape index: {}]
  %s4 = inlined_call_operand.vmem [shape: f32[2,8,768], index: 4, kind: output, shape index: {}]
  %s5 = sld [smem:[#allocation0]]
  $region49: #{clifford_g3_linear_vsilu.1} parent=0
    _
  %s7 = ssub.s32 1, %s5
  %s8 = scalar_select 0, %s7, %s5
  loop: start=0, step=1, limit=6
  $region2: #{clifford_g3_linear_vsilu.1} parent=0 // loop_pre_header
    _
  $region3: #{clifford_g3_linear_vsilu.1} parent=0 // loop_header
    %s10 = sphi 0, %s14
    %p11 = scmp.ge.s32.totalorder %s10, 6
    %s17 = sphi 0, %s29
    %s18 = sphi 0, %s25
    %s19 = sphi 0, %s17
    %s20 = sphi 0, %s18
    %s21 = sphi 0, %s19
    %s22 = sphi 0, %s20
    %s34 = sphi 0, %s36
    %s37 = sphi 0, %s34
    %s38 = sphi 0, %s37
    %s54 = sphi 0, %s38
    %s58 = sphi 0, %s58
    %s60 = sphi 0, %s58
    %s61 = sphi 0, %s60
    %s75 = sphi 0, %s61
    %s79 = sphi 0, %s79
    %s81 = sphi 0, %s79
    %s82 = sphi 0, %s81
    %s96 = sphi 0, %s82
    %s100 = sphi 0, %s100
    %s102 = sphi 0, %s100
    %s103 = sphi 0, %s102
    %s117 = sphi 0, %s103
    %s125 = sphi 0, %s127
    %s128 = sphi 0, %s125
    %s129 = sphi 0, %s128
    %s145 = sphi 0, %s129
  $region4: #{clifford_g3_linear_vsilu.1} parent=0 // loop_header_branch
    %13 = sbr.rel (%p11) target = $region8
  $region5: #{clifford_g3_linear_vsilu.1} parent=0 // loop_body
    %s15 = ssub.s32 %s10, 1
    %s16 = ssub.s32 %s10, 2
    %s23 = sadd.s32 1, %s18
    %p24 = scmp.ge.s32.totalorder %s23, 2
    %s25 = scalar_select %p24, 0, %s23
    %s26 = sadd.s32 1, %s17
    %s27 = scalar_select %p24, %s26, %s17
    %p28 = scmp.ge.s32.totalorder %s27, 2
    %s29 = scalar_select %p28, 0, %s27
    %s30 = ssub.s32 %s17, %s29
    %s31 = ssub.s32 %s18, %s25
    %s32 = sor.u32 %s30, %s31
    %p33 = scmp.eq.s32.totalorder %s32, 0
    %s35 = sadd.s32 %s34, 1
    %s36 = scalar_select %p33, %s34, %s35
    %p39 = pneg %p33
    %p40 = scmp.eq.s32.totalorder %s10, 3
    %p41 = por %p39, %p40
    %p42 = scmp.ne.s32.totalorder %s34, %s37
    %p43 = scmp.eq.s32.totalorder %s10, 0
    %p44 = por %p42, %p43
    %p45 = scmp.ne.s32.totalorder %s34, %s37
    %p46 = scmp.eq.s32.totalorder %s15, 3
    %p47 = por %p45, %p46
    %p48 = scmp.ne.s32.totalorder %s37, %s38
    %p49 = scmp.eq.s32.totalorder %s15, 0
    %p50 = por %p48, %p49
    %p51 = scmp.ne.s32.totalorder %s37, %s38
    %p52 = scmp.eq.s32.totalorder %s16, 3
    %p53 = por %p51, %p52
    %p55 = scmp.ne.s32.totalorder %s38, %s54
    %p56 = scmp.eq.s32.totalorder %s16, 0
    %p57 = por %p55, %p56
    %s59 = sadd.s32 %s58, 1
    %p62 = scmp.eq.s32.totalorder %s10, 3
    %p63 = scmp.ne.s32.totalorder %s58, %s60
    %p64 = scmp.eq.s32.totalorder %s10, 0
    %p65 = por %p63, %p64
    %p66 = scmp.ne.s32.totalorder %s58, %s60
    %p67 = scmp.eq.s32.totalorder %s15, 3
    %p68 = por %p66, %p67
    %p69 = scmp.ne.s32.totalorder %s60, %s61
    %p70 = scmp.eq.s32.totalorder %s15, 0
    %p71 = por %p69, %p70
    %p72 = scmp.ne.s32.totalorder %s60, %s61
    %p73 = scmp.eq.s32.totalorder %s16, 3
    %p74 = por %p72, %p73
    %p76 = scmp.ne.s32.totalorder %s61, %s75
    %p77 = scmp.eq.s32.totalorder %s16, 0
    %p78 = por %p76, %p77
    %s80 = sadd.s32 %s79, 1
    %p83 = scmp.eq.s32.totalorder %s10, 3
    %p84 = scmp.ne.s32.totalorder %s79, %s81
    %p85 = scmp.eq.s32.totalorder %s10, 0
    %p86 = por %p84, %p85
    %p87 = scmp.ne.s32.totalorder %s79, %s81
    %p88 = scmp.eq.s32.totalorder %s15, 3
    %p89 = por %p87, %p88
    %p90 = scmp.ne.s32.totalorder %s81, %s82
    %p91 = scmp.eq.s32.totalorder %s15, 0
    %p92 = por %p90, %p91
    %p93 = scmp.ne.s32.totalorder %s81, %s82
    %p94 = scmp.eq.s32.totalorder %s16, 3
    %p95 = por %p93, %p94
    %p97 = scmp.ne.s32.totalorder %s82, %s96
    %p98 = scmp.eq.s32.totalorder %s16, 0
    %p99 = por %p97, %p98
    %s101 = sadd.s32 %s100, 1
    %p104 = scmp.eq.s32.totalorder %s10, 3
    %p105 = scmp.ne.s32.totalorder %s100, %s102
    %p106 = scmp.eq.s32.totalorder %s10, 0
    %p107 = por %p105, %p106
    %p108 = scmp.ne.s32.totalorder %s100, %s102
    %p109 = scmp.eq.s32.totalorder %s15, 3
    %p110 = por %p108, %p109
    %p111 = scmp.ne.s32.totalorder %s102, %s103
    %p112 = scmp.eq.s32.totalorder %s15, 0
    %p113 = por %p111, %p112
    %p114 = scmp.ne.s32.totalorder %s102, %s103
    %p115 = scmp.eq.s32.totalorder %s16, 3
    %p116 = por %p114, %p115
    %p118 = scmp.ne.s32.totalorder %s103, %s117
    %p119 = scmp.eq.s32.totalorder %s16, 0
    %p120 = por %p118, %p119
    %s121 = ssub.s32 %s17, %s29
    %s122 = ssub.s32 %s18, %s25
    %s123 = sor.u32 %s121, %s122
    %p124 = scmp.eq.s32.totalorder %s123, 0
    %s126 = sadd.s32 %s125, 1
    %s127 = scalar_select %p124, %s125, %s126
    %p130 = pneg %p124
    %p131 = scmp.eq.s32.totalorder %s10, 3
    %p132 = por %p130, %p131
    %p133 = scmp.ne.s32.totalorder %s125, %s128
    %p134 = scmp.eq.s32.totalorder %s10, 0
    %p135 = por %p133, %p134
    %p136 = scmp.ne.s32.totalorder %s125, %s128
    %p137 = scmp.eq.s32.totalorder %s15, 3
    %p138 = por %p136, %p137
    %p139 = scmp.ne.s32.totalorder %s128, %s129
    %p140 = scmp.eq.s32.totalorder %s15, 0
    %p141 = por %p139, %p140
    %p142 = scmp.ne.s32.totalorder %s128, %s129
    %p143 = scmp.eq.s32.totalorder %s16, 3
    %p144 = por %p142, %p143
    %p146 = scmp.ne.s32.totalorder %s129, %s145
    %p147 = scmp.eq.s32.totalorder %s16, 0
    %p148 = por %p146, %p147
    %p149 = scmp.le.s32.totalorder 1, %s10
    %p150 = scmp.lt.s32.totalorder %s10, 5
    %p151 = pnand %p149, %p150
    %p152 = pneg %p151
    // Predicated region
    $region9: #{clifford_g3_linear_vsilu.1} parent=5 // pred_check
      _
    $region10: #{clifford_g3_linear_vsilu.1} parent=5 // pred_check_branch
      %154 = sbr.rel (%p151) target = $region12
    $region11: #{clifford_g3_linear_vsilu.1} parent=5 // pred_region
      %s155 = ssub.s32 %s10, 1
      // Predicated region
      $region13: #{clifford_g3_linear_vsilu.1} parent=11 // pred_check
        %p156 = pneg %p71
      $region14: #{clifford_g3_linear_vsilu.1} parent=11 // pred_check_branch
        %158 = sbr.rel (%p156) target = $region16
      $region15: #{clifford_g3_linear_vsilu.1} parent=11 // pred_region
        _
      $region16: #{clifford_g3_linear_vsilu.1} parent=11 // pred_fallthru
        _
      // Predicated region
      $region17: #{clifford_g3_linear_vsilu.1} parent=11 // pred_check
        %p159 = pneg %p92
      $region18: #{clifford_g3_linear_vsilu.1} parent=11 // pred_check_branch
        %161 = sbr.rel (%p159) target = $region20
      $region19: #{clifford_g3_linear_vsilu.1} parent=11 // pred_region
        _
      $region20: #{clifford_g3_linear_vsilu.1} parent=11 // pred_fallthru
        _
      // Predicated region
      $region21: #{clifford_g3_linear_vsilu.1} parent=11 // pred_check
        %p162 = pneg %p113
      $region22: #{clifford_g3_linear_vsilu.1} parent=11 // pred_check_branch
        %164 = sbr.rel (%p162) target = $region24
      $region23: #{clifford_g3_linear_vsilu.1} parent=11 // pred_region
        _
      $region24: #{clifford_g3_linear_vsilu.1} parent=11 // pred_fallthru
        _
    $region12: #{clifford_g3_linear_vsilu.1} parent=5 // pred_fallthru
      _
    %p165 = scmp.lt.s32.totalorder %s10, 4
    // Predicated region
    $region25: #{clifford_g3_linear_vsilu.1} parent=5 // pred_check
      %p166 = pneg %p165
    $region26: #{clifford_g3_linear_vsilu.1} parent=5 // pred_check_branch
      %168 = sbr.rel (%p166) target = $region28
    $region27: #{clifford_g3_linear_vsilu.1} parent=5 // pred_region
      // Predicated region
      $region29: #{clifford_g3_linear_vsilu.1} parent=27 // pred_check
        %p169 = pneg %p44
      $region30: #{clifford_g3_linear_vsilu.1} parent=27 // pred_check_branch
        %171 = sbr.rel (%p169) target = $region32
      $region31: #{clifford_g3_linear_vsilu.1} parent=27 // pred_region
        %s172 = smul.u32 3, %s18
        %p173 = scmp.lt.s32.totalorder %s17, 1
        %s174 = scalar_select %p173, %s17, 1
        %p175 = scmp.lt.s32.totalorder %s172, 5
        %s176 = scalar_select %p175, %s172, 5
        %s177 = smul.addr %s174, 6
        %s178 = sadd.s32 %s176, %s177
        %s179 = smul.addr %s178, 8
        %s180 = scalar_lea.vmem %s0, %s179
        %s181 = smul.u32 3, %s18
      $region32: #{clifford_g3_linear_vsilu.1} parent=27 // pred_fallthru
        _
    $region28: #{clifford_g3_linear_vsilu.1} parent=5 // pred_fallthru
      _
    %p182 = scmp.le.s32.totalorder 1, %s10
    %p183 = scmp.lt.s32.totalorder %s10, 5
    %p184 = pnand %p182, %p183
    %p185 = pneg %p184
    // Predicated region
    $region33: #{clifford_g3_linear_vsilu.1} parent=5 // pred_check
      _
    $region34: #{clifford_g3_linear_vsilu.1} parent=5 // pred_check_branch
      %187 = sbr.rel (%p184) target = $region36
    $region35: #{clifford_g3_linear_vsilu.1} parent=5 // pred_region
      %s188 = ssub.s32 %s10, 1
      %s189 = smul.u32 3, %s20
      %p190 = scmp.lt.s32.totalorder %s19, 1
      %s191 = scalar_select %p190, %s19, 1
      %p192 = scmp.lt.s32.totalorder %s189, 5
      %s193 = scalar_select %p192, %s189, 5
      %s194 = smul.addr %s191, 6
      %s195 = sadd.s32 %s193, %s194
      %s196 = smul.addr %s195, 8
      %s197 = scalar_lea.vmem %s0, %s196
      %p198 = pneg %p50
      %p199 = pneg %p47
      %p200 = pneg %p71
      %p201 = pneg %p68
      %p202 = pneg %p92
      %p203 = pneg %p89
      %p204 = pneg %p113
      %p205 = pneg %p110
      %p206 = pneg %p141
      %p207 = pneg %p138
      %s208 = smul.u32 3, %s20
      %p209 = scmp.lt.s32.totalorder %s19, 1
      %s210 = scalar_select %p209, %s19, 1
      %p211 = scmp.lt.s32.totalorder %s208, 5
      %s212 = scalar_select %p211, %s208, 5
      %s213 = smul.addr %s210, 6
      %s214 = sadd.s32 %s212, %s213
      %s215 = smul.addr %s214, 8
      %s216 = scalar_lea.vmem %s4, %s215
      %s217 = smul.u32 3, %s20
      %p218 = scmp.lt.s32.totalorder %s19, 1
      %s219 = scalar_select %p218, %s19, 1
      %p220 = scmp.lt.s32.totalorder %s217, 5
      %s221 = scalar_select %p220, %s217, 5
      %s222 = smul.addr %s219, 6
      %s223 = sadd.s32 %s221, %s222
      %s224 = smul.addr %s223, 8
      %s225 = scalar_lea.vmem %s0, %s224
      %s226 = smul.u32 3, %s20
      %s227 = smul.u32 3, %s20
      %p228 = scmp.lt.s32.totalorder %s19, 1
      %s229 = scalar_select %p228, %s19, 1
      %p230 = scmp.lt.s32.totalorder %s227, 5
      %s231 = scalar_select %p230, %s227, 5
      %s232 = smul.addr %s229, 6
      %s233 = sadd.s32 %s231, %s232
      %s234 = smul.addr %s233, 8
      %s235 = scalar_lea.vmem %s4, %s234
      %s236 = smul.u32 3, %s20
      %v237 = vld [vmem:[%s225] sm:$0xff]
      %v238 = vld [vmem:[%s225 + $0x8] sm:$0xff]
      %v239 = vld [vmem:[%s225 + $0x10] sm:$0xff]
      %v240 = vld [vmem:[%s3] sm:$0x7]
      %vm241 = vcmp.eq.s32.totalorder %v240, 0
      %vm242 = vcmp.eq.s32.totalorder %v240, 1
      %243 = vrot.lane.b32.xlu0 %v237, 1
      %v244 = vpop.permute.xlu0 %243
      %245 = vrot.lane.b32.xlu0 %v238, 1
      %v246 = vpop.permute.xlu0 %245
      %247 = vrot.lane.b32.xlu0 %v239, 1
      %v248 = vpop.permute.xlu0 %247
      %v249 = vlaneseq
      %v250 = vand.u32 %v249, 127
      %vm251 = vcmp.lt.s32.totalorder %v250, 1
      %v252 = vsel %vm251, %v246, %v248
      %v253 = vsel %vm251, %v244, %v246
      %v254 = vsel %vm251, %v248, %v244
      %255 = vrot.lane.b32.xlu0 %v237, 2
      %v256 = vpop.permute.xlu0 %255
      %257 = vrot.lane.b32.xlu0 %v238, 2
      %v258 = vpop.permute.xlu0 %257
      %259 = vrot.lane.b32.xlu0 %v239, 2
      %v260 = vpop.permute.xlu0 %259
      %vm261 = vcmp.lt.s32.totalorder %v250, 2
      %v262 = vsel %vm261, %v258, %v260
      %v263 = vsel %vm261, %v256, %v258
      %v264 = vsel %vm261, %v260, %v256
      %265 = vrot.lane.b32.xlu0 %v237, 127
      %v266 = vpop.permute.xlu0 %265
      %267 = vrot.lane.b32.xlu0 %v238, 127
      %v268 = vpop.permute.xlu0 %267
      %269 = vrot.lane.b32.xlu0 %v239, 127
      %v270 = vpop.permute.xlu0 %269
      %vm271 = vcmp.lt.s32.totalorder %v250, 127
      %v272 = vsel %vm271, %v268, %v270
      %v273 = vsel %vm271, %v266, %v268
      %v274 = vsel %vm271, %v270, %v266
      %275 = vrot.lane.b32.xlu0 %v237, 126
      %v276 = vpop.permute.xlu0 %275
      %277 = vrot.lane.b32.xlu0 %v238, 126
      %v278 = vpop.permute.xlu0 %277
      %279 = vrot.lane.b32.xlu0 %v239, 126
      %v280 = vpop.permute.xlu0 %279
      %vm281 = vcmp.lt.s32.totalorder %v250, 126
      %v282 = vsel %vm281, %v278, %v280
      %v283 = vsel %vm281, %v276, %v278
      %v284 = vsel %vm281, %v280, %v276
      %v285 = vsel %vm242, 1, 0
      %v286 = vlaneseq
      %v287 = vshrl.u32 %v286, 7
      %v288 = vsub.s32 0, %v287
      %v289 = vrot.slane %v285, %v288
      %v290 = vlaneseq
      %v291 = vshrl.u32 %v290, 7
      %v292 = vsub.s32 1, %v291
      %v293 = vrot.slane %v285, %v292
      %v294 = vlaneseq
      %v295 = vshrl.u32 %v294, 7
      %v296 = vsub.s32 2, %v295
      %v297 = vrot.slane %v285, %v296
      %vm298 = vcmp.eq.s32.totalorder %v289, 1
      %vm299 = vcmp.eq.s32.totalorder %v293, 1
      %vm300 = vcmp.eq.s32.totalorder %v297, 1
      %v301 = vsel %vm298, %v254, %v264
      %v302 = vsel %vm299, %v253, %v263
      %v303 = vsel %vm300, %v252, %v262
      %v304 = vsel %vm241, 1, 0
      %v305 = vlaneseq
      %v306 = vshrl.u32 %v305, 7
      %v307 = vsub.s32 0, %v306
      %v308 = vrot.slane %v304, %v307
      %v309 = vlaneseq
      %v310 = vshrl.u32 %v309, 7
      %v311 = vsub.s32 1, %v310
      %v312 = vrot.slane %v304, %v311
      %v313 = vlaneseq
      %v314 = vshrl.u32 %v313, 7
      %v315 = vsub.s32 2, %v314
      %v316 = vrot.slane %v304, %v315
      %vm317 = vcmp.eq.s32.totalorder %v308, 1
      %vm318 = vcmp.eq.s32.totalorder %v312, 1
      %vm319 = vcmp.eq.s32.totalorder %v316, 1
      %v320 = vsel %vm317, %v237, %v301
      %v321 = vsel %vm318, %v238, %v302
      %v322 = vsel %vm319, %v239, %v303
      %v323 = vsel %vm298, %v237, %v254
      %v324 = vsel %vm299, %v238, %v253
      %v325 = vsel %vm300, %v239, %v252
      %v326 = vsel %vm317, %v273, %v323
      %v327 = vsel %vm318, %v272, %v324
      %v328 = vsel %vm319, %v274, %v325
      %v329 = vsel %vm298, %v273, %v237
      %v330 = vsel %vm299, %v272, %v238
      %v331 = vsel %vm300, %v274, %v239
      %v332 = vsel %vm317, %v283, %v329
      %v333 = vsel %vm318, %v282, %v330
      %v334 = vsel %vm319, %v284, %v331
      %v335 = vld [vmem:[%s1] sm:$0xff]
      %s336 = scalar_lea.vmem %s1, 8
      %v337 = vld [vmem:[%s336] sm:$0xff]
      %s338 = scalar_lea.vmem %s1, 16
      %v339 = vld [vmem:[%s338] sm:$0xff]
      %341 = vset.pattern.permute.xlu0 0
      %342 = vperm.xlu0 %341, %v335
      %v343 = vpop.permute.xlu0 %342
      %v345 = vmul.f32 %v343, %v320
      %v346 = vmul.f32 %v343, %v321
      %v347 = vmul.f32 %v343, %v322
      %349 = vset.pattern.permute.xlu0 0
      %350 = vperm.xlu0 %349, %v337
      %v351 = vpop.permute.xlu0 %350
      %v353 = vmul.f32 %v351, %v326
      %v354 = vmul.f32 %v351, %v327
      %v355 = vmul.f32 %v351, %v328
      %v356 = vadd.f32 %v345, %v353
      %v357 = vadd.f32 %v346, %v354
      %v358 = vadd.f32 %v347, %v355
      %360 = vset.pattern.permute.xlu0 0
      %361 = vperm.xlu0 %360, %v339
      %v362 = vpop.permute.xlu0 %361
      %v364 = vmul.f32 %v362, %v332
      %v365 = vmul.f32 %v362, %v333
      %v366 = vmul.f32 %v362, %v334
      %v367 = vadd.f32 %v356, %v364
      %v368 = vadd.f32 %v357, %v365
      %v369 = vadd.f32 %v358, %v366
      %v370 = vld [vmem:[%s2] sm:$0xff]
      %372 = vset.pattern.permute.xlu0 0
      %373 = vperm.xlu0 %372, %v370
      %v374 = vpop.permute.xlu0 %373
      %v376 = vadd.f32 %v367, %v374
      %v377 = vadd.f32 %v368, %v374
      %v378 = vadd.f32 %v369, %v374
      %v379 = vsub.f32 0.0, %v376
      %v380 = vsub.f32 0.0, %v377
      %v381 = vsub.f32 0.0, %v378
      %v382 = vmul.f32 %v379, 1.442695
      %v383 = vpow.pop %v382
      %v384 = vmul.f32 %v380, 1.442695
      %v385 = vpow.pop %v384
      %v386 = vmul.f32 %v381, 1.442695
      %v387 = vpow.pop %v386
      %v388 = vadd.f32 %v383, 1.0
      %v389 = vadd.f32 %v385, 1.0
      %v390 = vadd.f32 %v387, 1.0
      %v391 = vrcp.pop %v388
      %v392 = vrcp.pop %v389
      %v393 = vrcp.pop %v390
      %v394 = vmul.f32 %v237, %v391
      %v395 = vmul.f32 %v238, %v392
      %v396 = vmul.f32 %v239, %v393
      %397 = vst [vmem:[%s235] sm:$0xff] %v394
      %398 = vst [vmem:[%s235 + $0x8] sm:$0xff] %v395
      %399 = vst [vmem:[%s235 + $0x10] sm:$0xff] %v396
      %s400 = smul.u32 3, %s20
      %p401 = scmp.lt.s32.totalorder %s19, 1
      %s402 = scalar_select %p401, %s19, 1
      %p403 = scmp.lt.s32.totalorder %s400, 5
      %s404 = scalar_select %p403, %s400, 5
      %s405 = smul.addr %s402, 6
      %s406 = sadd.s32 %s404, %s405
      %s407 = smul.addr %s406, 8
      %s408 = scalar_lea.vmem %s4, %s407
      // Predicated region
      $region37: #{clifford_g3_linear_vsilu.1} parent=35 // pred_check
        %p409 = pneg %p138
      $region38: #{clifford_g3_linear_vsilu.1} parent=35 // pred_check_branch
        %411 = sbr.rel (%p409) target = $region40
      $region39: #{clifford_g3_linear_vsilu.1} parent=35 // pred_region
        %s412 = smul.u32 3, %s20
      $region40: #{clifford_g3_linear_vsilu.1} parent=35 // pred_fallthru
        _
    $region36: #{clifford_g3_linear_vsilu.1} parent=5 // pred_fallthru
      _
    %p413 = scmp.le.s32.totalorder 2, %s10
    // Predicated region
    $region41: #{clifford_g3_linear_vsilu.1} parent=5 // pred_check
      %p414 = pneg %p413
    $region42: #{clifford_g3_linear_vsilu.1} parent=5 // pred_check_branch
      %416 = sbr.rel (%p414) target = $region44
    $region43: #{clifford_g3_linear_vsilu.1} parent=5 // pred_region
      %s417 = ssub.s32 %s10, 2
      // Predicated region
      $region45: #{clifford_g3_linear_vsilu.1} parent=43 // pred_check
        %p418 = pneg %p144
      $region46: #{clifford_g3_linear_vsilu.1} parent=43 // pred_check_branch
        %420 = sbr.rel (%p418) target = $region48
      $region47: #{clifford_g3_linear_vsilu.1} parent=43 // pred_region
        %s421 = smul.u32 3, %s22
        %p422 = scmp.lt.s32.totalorder %s21, 1
        %s423 = scalar_select %p422, %s21, 1
        %p424 = scmp.lt.s32.totalorder %s421, 5
        %s425 = scalar_select %p424, %s421, 5
        %s426 = smul.addr %s423, 6
        %s427 = sadd.s32 %s425, %s426
        %s428 = smul.addr %s427, 8
        %s429 = scalar_lea.vmem %s4, %s428
      $region48: #{clifford_g3_linear_vsilu.1} parent=43 // pred_fallthru
        _
    $region44: #{clifford_g3_linear_vsilu.1} parent=5 // pred_fallthru
      _
  $region6: #{clifford_g3_linear_vsilu.1} parent=0 // loop_footer
    %s14 = sadd.s32 1, %s10
  $region7: #{clifford_g3_linear_vsilu.1} parent=0 // loop_footer_branch
    %9 = sbr.rel target = $region3
  $region8: #{clifford_g3_linear_vsilu.1} parent=0 // loop_exit
    _

</llo_original>
